<compile_context>
chip_gen: v5e
topology: v5e:2x2
jax: 0.10.0
libtpu: 0.0.40
codegen_flags: <defaults>
</compile_context>

<pallas_src>
import jax
import jax.numpy as jnp
from jax.experimental import pallas as pl
from jax.experimental.pallas import tpu as pltpu


def _sublanes(dtype) -> int:
    """Packed sublane count of one vreg tile for this dtype."""
    return {2: 16, 1: 32}.get(jnp.dtype(dtype).itemsize, 8)


def _vmem_budget():
    """(target block bytes, vmem_limit_bytes, physical VMEM bytes) — generation aware."""
    phys = 64 << 20                      # assume smallest (v7x) if the query fails
    try:
        phys = int(pltpu.get_tpu_info().vmem_capacity_bytes)
    except Exception:
        pass
    if phys >= 96 << 20:                 # v5e / v6e: 128 MiB per TensorCore
        return 8 << 20, 64 << 20, phys
    return 6 << 20, 44 << 20, phys       # v7x: 64 MiB per TensorCore (and fallback)


def _make_ln_kernel(channels: int, eps: float):
    # torch.var default is unbiased (divide by C-1); guard C==1 at trace time
    # (torch would produce NaN there; this returns beta instead — C==1 is unused).
    inv_cm1 = 1.0 / float(max(channels - 1, 1))

    def ln_kernel(x_ref, g_ref, b_ref, o_ref):
        # Works for both layouts: axis=1 is always the channel axis.
        x = x_ref[...].astype(jnp.float32)
        mean = jnp.mean(x, axis=1, keepdims=True)
        d = x - mean
        var = jnp.sum(d * d, axis=1, keepdims=True) * inv_cm1
        inv = jax.lax.rsqrt(var + eps)
        y = d * inv * g_ref[...].astype(jnp.float32) + b_ref[...].astype(jnp.float32)
        o_ref[...] = y.astype(o_ref.dtype)

    return ln_kernel


def layernorm_nchw(x, gamma, beta, eps=1e-8):
    """x: (N, C, H, W), gamma/beta: (1, C, 1, 1). Returns (N, C, H, W)."""
    N, C, H, W = x.shape
    HW = H * W
    itemsize = jnp.dtype(x.dtype).itemsize
    sub = _sublanes(x.dtype)
    target_bytes, vmem_limit, phys = _vmem_budget()

    use_leading_c = (C % sub != 0) and (HW % 128 == 0)

    if use_leading_c:
        # (N, C, HW//128, 128): reduce over the leading C axis -> full-vreg adds,
        # every lane/sublane useful even for tiny C.
        n_rows = HW // 128
        row_bytes = C * 128 * itemsize
        s = max(sub, (target_bytes // max(row_bytes, 1)) // sub * sub)
        s = min(s, pl.cdiv(n_rows, sub) * sub)
        # keep >= 2 grid blocks so v7x's two TensorCores both get work
        while N * pl.cdiv(n_rows, s) < 2 and s > sub:
            s = max(sub, (s // 2) // sub * sub)
        block_bytes = row_bytes * s

        x_view = x.reshape(N, C, n_rows, 128)          # free reshape, no transpose
        g_view = gamma.reshape(1, C, 1, 1)
        b_view = beta.reshape(1, C, 1, 1)
        grid = (N, pl.cdiv(n_rows, s))
        in_specs = [
            pl.BlockSpec((1, C, s, 128), lambda n, t: (n, 0, t, 0)),
            pl.BlockSpec((1, C, 1, 1), lambda n, t: (0, 0, 0, 0)),
            pl.BlockSpec((1, C, 1, 1), lambda n, t: (0, 0, 0, 0)),
        ]
        out_spec = pl.BlockSpec((1, C, s, 128), lambda n, t: (n, 0, t, 0))
        out_shape = jax.ShapeDtypeStruct((N, C, n_rows, 128), x.dtype)
    else:
        # (N, C, HW): C on sublanes, lane-dense spatial tile (multiple of 128).
        ts = max(128, (target_bytes // max(C * itemsize, 1)) // 128 * 128)
        ts = min(ts, pl.cdiv(HW, 128) * 128)
        while N * pl.cdiv(HW, ts) < 2 and ts > 128:
            ts = max(128, (ts // 2) // 128 * 128)
        block_bytes = C * ts * itemsize
        # TODO(synk): for extreme C (C*128*itemsize > VMEM budget) split C across
        # grid steps with a VMEM accumulator; not needed for this model.

        x_view = x.reshape(N, C, HW)                   # free reshape, no transpose
        g_view = gamma.reshape(1, C, 1)
        b_view = beta.reshape(1, C, 1)
        grid = (N, pl.cdiv(HW, ts))
        in_specs = [
            pl.BlockSpec((1, C, ts), lambda n, t: (n, 0, t)),
            pl.BlockSpec((1, C, 1), lambda n, t: (0, 0, 0)),
            pl.BlockSpec((1, C, 1), lambda n, t: (0, 0, 0)),
        ]
        out_spec = pl.BlockSpec((1, C, ts), lambda n, t: (n, 0, t))
        out_shape = jax.ShapeDtypeStruct((N, C, HW), x.dtype)

    # In + out are each double-buffered: make sure the declared VMEM limit covers
    # ~4x the block (plus slack), without exceeding physical VMEM.
    needed = 4 * block_bytes + (2 << 20)
    if needed > vmem_limit:
        vmem_limit = min(needed, max(phys - (16 << 20), vmem_limit))

    out = pl.pallas_call(
        _make_ln_kernel(C, eps),
        out_shape=out_shape,
        grid_spec=pltpu.PrefetchScalarGridSpec(
            num_scalar_prefetch=0,
            grid=grid,
            in_specs=in_specs,
            out_specs=out_spec,
        ),
        compiler_params=pltpu.CompilerParams(
            dimension_semantics=("parallel", "parallel"),
            vmem_limit_bytes=int(vmem_limit),
        ),
    )(x_view, g_view, b_view)

    return out.reshape(N, C, H, W)


def layernorm_ref(x, gamma, beta, eps=1e-8):
    """Pure-JAX reference mirroring the PyTorch module (unbiased variance)."""
    mean = jnp.mean(x, axis=1, keepdims=True)
    var = jnp.var(x, axis=1, keepdims=True, ddof=1)
    return (x - mean) / jnp.sqrt(var + eps) * gamma + beta


if __name__ == "__main__":
    key = jax.random.PRNGKey(0)

    # Shapes implied by the module: NCHW with per-channel affine params.
    N, C, H, W = 2, 4, 16, 16
    x = jax.random.normal(key, (N, C, H, W), dtype=jnp.float32)
    gamma = jnp.ones((1, C, 1, 1), dtype=jnp.float32)   # module init values
    beta = jnp.zeros((1, C, 1, 1), dtype=jnp.float32)

    out = jax.block_until_ready(layernorm_nchw(x, gamma, beta))
    assert out.shape == (N, C, H, W)
    assert jnp.allclose(out, layernorm_ref(x, gamma, beta), atol=1e-5, rtol=1e-5), \
        "mismatch vs reference (leading-C layout)"

    # Exercise the sublane-C layout + ragged spatial edge (HW % 128 != 0),
    # with non-trivial affine params.
    k2 = jax.random.PRNGKey(1)
    N2, C2, H2, W2 = 2, 16, 12, 12
    x2 = jax.random.normal(k2, (N2, C2, H2, W2), dtype=jnp.float32)
    g2 = jnp.full((1, C2, 1, 1), 1.5, dtype=jnp.float32)
    b2 = jnp.full((1, C2, 1, 1), 0.25, dtype=jnp.float32)
    out2 = jax.block_until_ready(layernorm_nchw(x2, g2, b2))
    assert jnp.allclose(out2, layernorm_ref(x2, g2, b2), atol=1e-5, rtol=1e-5), \
        "mismatch vs reference (sublane-C layout / ragged edge)"

    print("KERNEL_OK")
</pallas_src>

<mosaic_0001>
module attributes {stable_mosaic.version = 11 : i64} {
  func.func @ln_kernel(%arg0: i32, %arg1: i32, %arg2: memref<1x4x8x128xf32, #tpu.memory_space<vmem>>, %arg3: memref<1x4x1x1xf32, #tpu.memory_space<vmem>>, %arg4: memref<1x4x1x1xf32, #tpu.memory_space<vmem>>, %arg5: memref<1x4x8x128xf32, #tpu.memory_space<vmem>>) attributes {dimension_semantics = [#tpu.dimension_semantics<parallel>, #tpu.dimension_semantics<parallel>], iteration_bounds = array<i64: 2, 1>, scalar_prefetch = 0 : i64, scratch_operands = 0 : i64, tpu.core_type = #tpu.core_type<tc>, window_params = [{transform_indices = @transform_0, window_bounds = array<i64: 1, 4, 8, 128>}, {pipeline_mode = #tpu.pipeline_mode<synchronous>, transform_indices = @transform_1, window_bounds = array<i64: 1, 4, 1, 1>}, {pipeline_mode = #tpu.pipeline_mode<synchronous>, transform_indices = @transform_2, window_bounds = array<i64: 1, 4, 1, 1>}, {transform_indices = @transform_3, window_bounds = array<i64: 1, 4, 8, 128>}]} {
    %c0 = arith.constant 0 : index
    %c0_0 = arith.constant 0 : index
    %c0_1 = arith.constant 0 : index
    %c0_2 = arith.constant 0 : index
    %0 = vector.load %arg2[%c0, %c0_0, %c0_1, %c0_2] : memref<1x4x8x128xf32, #tpu.memory_space<vmem>>, vector<1x4x8x128xf32>
    %cst = arith.constant dense<0.000000e+00> : vector<1x8x128xf32>
    %1 = vector.multi_reduction <add>, %0, %cst [1] : vector<1x4x8x128xf32> to vector<1x8x128xf32>
    %2 = vector.shape_cast %1 : vector<1x8x128xf32> to vector<1x1x8x128xf32>
    %cst_3 = arith.constant 4.000000e+00 : f32
    %3 = vector.broadcast %cst_3 : f32 to vector<1x1x8x128xf32>
    %4 = arith.divf %2, %3 : vector<1x1x8x128xf32>
    %5 = vector.broadcast %4 : vector<1x1x8x128xf32> to vector<1x4x8x128xf32>
    %6 = arith.subf %0, %5 : vector<1x4x8x128xf32>
    %7 = arith.mulf %6, %6 : vector<1x4x8x128xf32>
    %cst_4 = arith.constant dense<0.000000e+00> : vector<1x8x128xf32>
    %8 = vector.multi_reduction <add>, %7, %cst_4 [1] : vector<1x4x8x128xf32> to vector<1x8x128xf32>
    %9 = vector.shape_cast %8 : vector<1x8x128xf32> to vector<1x1x8x128xf32>
    %cst_5 = arith.constant 0.333333343 : f32
    %10 = vector.broadcast %cst_5 : f32 to vector<1x1x8x128xf32>
    %11 = arith.mulf %9, %10 : vector<1x1x8x128xf32>
    %cst_6 = arith.constant 9.99999993E-9 : f32
    %12 = vector.broadcast %cst_6 : f32 to vector<1x1x8x128xf32>
    %13 = arith.addf %11, %12 : vector<1x1x8x128xf32>
    %14 = math.rsqrt %13 : vector<1x1x8x128xf32>
    %15 = vector.broadcast %14 : vector<1x1x8x128xf32> to vector<1x4x8x128xf32>
    %16 = arith.mulf %6, %15 : vector<1x4x8x128xf32>
    %c0_7 = arith.constant 0 : index
    %c0_8 = arith.constant 0 : index
    %c0_9 = arith.constant 0 : index
    %c0_10 = arith.constant 0 : index
    %17 = vector.load %arg3[%c0_7, %c0_8, %c0_9, %c0_10] : memref<1x4x1x1xf32, #tpu.memory_space<vmem>>, vector<1x4x1x1xf32>
    %18 = vector.broadcast %17 : vector<1x4x1x1xf32> to vector<1x4x8x128xf32>
    %19 = arith.mulf %16, %18 : vector<1x4x8x128xf32>
    %c0_11 = arith.constant 0 : index
    %c0_12 = arith.constant 0 : index
    %c0_13 = arith.constant 0 : index
    %c0_14 = arith.constant 0 : index
    %20 = vector.load %arg4[%c0_11, %c0_12, %c0_13, %c0_14] : memref<1x4x1x1xf32, #tpu.memory_space<vmem>>, vector<1x4x1x1xf32>
    %21 = vector.broadcast %20 : vector<1x4x1x1xf32> to vector<1x4x8x128xf32>
    %22 = arith.addf %19, %21 : vector<1x4x8x128xf32>
    %c0_15 = arith.constant 0 : index
    %c0_16 = arith.constant 0 : index
    %c0_17 = arith.constant 0 : index
    %c0_18 = arith.constant 0 : index
    %23 = vector.load %arg5[%c0_15, %c0_16, %c0_17, %c0_18] : memref<1x4x8x128xf32, #tpu.memory_space<vmem>>, vector<1x4x8x128xf32>
    tpu.vector_store %arg5[%c0_15, %c0_16, %c0_17, %c0_18], %22 {strides = array<i32>} : memref<1x4x8x128xf32, #tpu.memory_space<vmem>>, vector<1x4x8x128xf32>,
    return
  }
  func.func @transform_0(%arg0: i32, %arg1: i32) -> (i32, i32, i32, i32) {
    %c0_i32 = arith.constant 0 : i32
    %c0_i32_0 = arith.constant 0 : i32
    %c0_i32_1 = arith.constant 0 : i32
    return %arg0, %c0_i32, %arg1, %c0_i32_0 : i32, i32, i32, i32
  }
  func.func @transform_1(%arg0: i32, %arg1: i32) -> (i32, i32, i32, i32) {
    %c0_i32 = arith.constant 0 : i32
    %c0_i32_0 = arith.constant 0 : i32
    %c0_i32_1 = arith.constant 0 : i32
    %c0_i32_2 = arith.constant 0 : i32
    %c0_i32_3 = arith.constant 0 : i32
    return %c0_i32, %c0_i32_0, %c0_i32_1, %c0_i32_2 : i32, i32, i32, i32
  }
  func.func @transform_2(%arg0: i32, %arg1: i32) -> (i32, i32, i32, i32) {
    %c0_i32 = arith.constant 0 : i32
    %c0_i32_0 = arith.constant 0 : i32
    %c0_i32_1 = arith.constant 0 : i32
    %c0_i32_2 = arith.constant 0 : i32
    %c0_i32_3 = arith.constant 0 : i32
    return %c0_i32, %c0_i32_0, %c0_i32_1, %c0_i32_2 : i32, i32, i32, i32
  }
  func.func @transform_3(%arg0: i32, %arg1: i32) -> (i32, i32, i32, i32) {
    %c0_i32 = arith.constant 0 : i32
    %c0_i32_0 = arith.constant 0 : i32
    %c0_i32_1 = arith.constant 0 : i32
    return %arg0, %c0_i32, %arg1, %c0_i32_0 : i32, i32, i32, i32
  }
}

</mosaic_0001>

<llo_original>
// kernel: tpu_custom_call.1
$region0: #{tpu_custom_call.1}
  #allocation0 [shape = 'u32[]', space=smem, size = 0x4, offset = 0x4, fixed_abs, tag = 'smem constant byte address 0x4 - core index']
  #allocation1 [shape = 'u32[72,128]{1,0:T(1,128)}', space=vmem, size = 0x9000, scoped, tag = 'internal scratch']
  #allocation6 [shape = 's32[]', space=sflag, size = 0x4, offset = 0, fixed_abs, tag = 'sflag constant byte address 0x0 - dummy sync flag']
  #allocation8 [shape = 's32[]', space=sflag, size = 0x4, offset = 0, fixed_abs, tag = 'sflag constant byte address 0x0 - dummy sync flag']
  %s0 = inlined_call_operand.hbm [shape: f32[2,4,2,128], index: 0, kind: input, shape index: {}]
  %s1 = inlined_call_operand.vmem [shape: f32[1,4,1,1], index: 1, kind: input, shape index: {}]
  %s2 = inlined_call_operand.vmem [shape: f32[1,4,1,1], index: 2, kind: input, shape index: {}]
  %s3 = inlined_call_operand.hbm [shape: f32[2,4,2,128], index: 3, kind: output, shape index: {}]
  %s4 = sld [smem:[#allocation0]]
  $region49: #{tpu_custom_call.1} parent=0
    _
  %s6 = ssub.s32 1, %s4
  %s7 = scalar_select 0, %s6, %s4
  $region1: #{tpu_custom_call.1} parent=0
    #allocation2 [shape = 'u8[32768]{0}', space=vmem, size = 0x8000, scoped, tag = 'input window, operand 0']
    #allocation3 [shape = 's32[2]{0}', space=sflag, size = 0x8, scoped, tag = 'scoped memory for tpu_custom_call.1']
    #allocation4 [shape = 's32[2]{0}', space=sflag, size = 0x8, scoped, tag = 'scoped memory for tpu_custom_call.1']
    #allocation5 [shape = 'u8[32768]{0}', space=vmem, size = 0x8000, scoped, tag = 'output window, operand 0']
    %8 = vsyncpa [#allocation3], 0
    %s9 = scalar_lea.sflag [#allocation3], 1
    %10 = vsyncpa %s9, 0
    %11 = vsyncpa [#allocation4], 0
    %s12 = scalar_lea.sflag [#allocation4], 1
    %13 = vsyncpa %s12, 0
    loop: start=0, step=1, limit=4
    $region2: #{tpu_custom_call.1} parent=1 // loop_pre_header
      _
    $region3: #{tpu_custom_call.1} parent=1 // loop_header
      %s15 = sphi 0, %s19
      %p16 = scmp.ge.s32.totalorder %s15, 4
      %s22 = sphi 0, %s34
      %s23 = sphi 0, %s30
      %s24 = sphi 0, %s22
      %s25 = sphi 0, %s23
      %s26 = sphi 0, %s24
      %s27 = sphi 0, %s25
      %s39 = sphi 0, %s41
      %s42 = sphi 0, %s39
      %s43 = sphi 0, %s42
      %s59 = sphi 0, %s43
      %s63 = sphi 0, %s63
      %s65 = sphi 0, %s63
      %s66 = sphi 0, %s65
      %s80 = sphi 0, %s66
      %s84 = sphi 0, %s84
      %s86 = sphi 0, %s84
      %s87 = sphi 0, %s86
      %s101 = sphi 0, %s87
      %s109 = sphi 0, %s111
      %s112 = sphi 0, %s109
      %s113 = sphi 0, %s112
      %s129 = sphi 0, %s113
    $region4: #{tpu_custom_call.1} parent=1 // loop_header_branch
      %18 = sbr.rel (%p16) target = $region8
    $region5: #{tpu_custom_call.1} parent=1 // loop_body
      %s20 = ssub.s32 %s15, 1
      %s21 = ssub.s32 %s15, 2
      %s28 = sadd.s32 1, %s23
      %p29 = scmp.ge.s32.totalorder %s28, 1
      %s30 = scalar_select %p29, 0, %s28
      %s31 = sadd.s32 1, %s22
      %s32 = scalar_select %p29, %s31, %s22
      %p33 = scmp.ge.s32.totalorder %s32, 2
      %s34 = scalar_select %p33, 0, %s32
      %s35 = ssub.s32 %s22, %s34
      %s36 = ssub.s32 %s23, %s30
      %s37 = sor.u32 %s35, %s36
      %p38 = scmp.eq.s32.totalorder %s37, 0
      %s40 = sadd.s32 %s39, 1
      %s41 = scalar_select %p38, %s39, %s40
      %p44 = pneg %p38
      %p45 = scmp.eq.s32.totalorder %s15, 1
      %p46 = por %p44, %p45
      %p47 = scmp.ne.s32.totalorder %s39, %s42
      %p48 = scmp.eq.s32.totalorder %s15, 0
      %p49 = por %p47, %p48
      %p50 = scmp.ne.s32.totalorder %s39, %s42
      %p51 = scmp.eq.s32.totalorder %s20, 1
      %p52 = por %p50, %p51
      %p53 = scmp.ne.s32.totalorder %s42, %s43
      %p54 = scmp.eq.s32.totalorder %s20, 0
      %p55 = por %p53, %p54
      %p56 = scmp.ne.s32.totalorder %s42, %s43
      %p57 = scmp.eq.s32.totalorder %s21, 1
      %p58 = por %p56, %p57
      %p60 = scmp.ne.s32.totalorder %s43, %s59
      %p61 = scmp.eq.s32.totalorder %s21, 0
      %p62 = por %p60, %p61
      %s64 = sadd.s32 %s63, 1
      %p67 = scmp.eq.s32.totalorder %s15, 1
      %p68 = scmp.ne.s32.totalorder %s63, %s65
      %p69 = scmp.eq.s32.totalorder %s15, 0
      %p70 = por %p68, %p69
      %p71 = scmp.ne.s32.totalorder %s63, %s65
      %p72 = scmp.eq.s32.totalorder %s20, 1
      %p73 = por %p71, %p72
      %p74 = scmp.ne.s32.totalorder %s65, %s66
      %p75 = scmp.eq.s32.totalorder %s20, 0
      %p76 = por %p74, %p75
      %p77 = scmp.ne.s32.totalorder %s65, %s66
      %p78 = scmp.eq.s32.totalorder %s21, 1
      %p79 = por %p77, %p78
      %p81 = scmp.ne.s32.totalorder %s66, %s80
      %p82 = scmp.eq.s32.totalorder %s21, 0
      %p83 = por %p81, %p82
      %s85 = sadd.s32 %s84, 1
      %p88 = scmp.eq.s32.totalorder %s15, 1
      %p89 = scmp.ne.s32.totalorder %s84, %s86
      %p90 = scmp.eq.s32.totalorder %s15, 0
      %p91 = por %p89, %p90
      %p92 = scmp.ne.s32.totalorder %s84, %s86
      %p93 = scmp.eq.s32.totalorder %s20, 1
      %p94 = por %p92, %p93
      %p95 = scmp.ne.s32.totalorder %s86, %s87
      %p96 = scmp.eq.s32.totalorder %s20, 0
      %p97 = por %p95, %p96
      %p98 = scmp.ne.s32.totalorder %s86, %s87
      %p99 = scmp.eq.s32.totalorder %s21, 1
      %p100 = por %p98, %p99
      %p102 = scmp.ne.s32.totalorder %s87, %s101
      %p103 = scmp.eq.s32.totalorder %s21, 0
      %p104 = por %p102, %p103
      %s105 = ssub.s32 %s22, %s34
      %s106 = ssub.s32 %s23, %s30
      %s107 = sor.u32 %s105, %s106
      %p108 = scmp.eq.s32.totalorder %s107, 0
      %s110 = sadd.s32 %s109, 1
      %s111 = scalar_select %p108, %s109, %s110
      %p114 = pneg %p108
      %p115 = scmp.eq.s32.totalorder %s15, 1
      %p116 = por %p114, %p115
      %p117 = scmp.ne.s32.totalorder %s109, %s112
      %p118 = scmp.eq.s32.totalorder %s15, 0
      %p119 = por %p117, %p118
      %p120 = scmp.ne.s32.totalorder %s109, %s112
      %p121 = scmp.eq.s32.totalorder %s20, 1
      %p122 = por %p120, %p121
      %p123 = scmp.ne.s32.totalorder %s112, %s113
      %p124 = scmp.eq.s32.totalorder %s20, 0
      %p125 = por %p123, %p124
      %p126 = scmp.ne.s32.totalorder %s112, %s113
      %p127 = scmp.eq.s32.totalorder %s21, 1
      %p128 = por %p126, %p127
      %p130 = scmp.ne.s32.totalorder %s113, %s129
      %p131 = scmp.eq.s32.totalorder %s21, 0
      %p132 = por %p130, %p131
      %p133 = scmp.le.s32.totalorder 1, %s15
      %p134 = scmp.lt.s32.totalorder %s15, 3
      %p135 = pnand %p133, %p134
      %p136 = pneg %p135
      // Predicated region
      $region9: #{tpu_custom_call.1} parent=5 // pred_check
        _
      $region10: #{tpu_custom_call.1} parent=5 // pred_check_branch
        %138 = sbr.rel (%p135) target = $region12
      $region11: #{tpu_custom_call.1} parent=5 // pred_region
        %s139 = ssub.s32 %s15, 1
        // Predicated region
        $region13: #{tpu_custom_call.1} parent=11 // pred_check
          %p140 = pneg %p76
        $region14: #{tpu_custom_call.1} parent=11 // pred_check_branch
          %142 = sbr.rel (%p140) target = $region16
        $region15: #{tpu_custom_call.1} parent=11 // pred_region
          _
        $region16: #{tpu_custom_call.1} parent=11 // pred_fallthru
          _
        // Predicated region
        $region17: #{tpu_custom_call.1} parent=11 // pred_check
          %p143 = pneg %p97
        $region18: #{tpu_custom_call.1} parent=11 // pred_check_branch
          %145 = sbr.rel (%p143) target = $region20
        $region19: #{tpu_custom_call.1} parent=11 // pred_region
          _
        $region20: #{tpu_custom_call.1} parent=11 // pred_fallthru
          _
      $region12: #{tpu_custom_call.1} parent=5 // pred_fallthru
        _
      %p146 = scmp.lt.s32.totalorder %s15, 2
      // Predicated region
      $region21: #{tpu_custom_call.1} parent=5 // pred_check
        %p147 = pneg %p146
      $region22: #{tpu_custom_call.1} parent=5 // pred_check_branch
        %149 = sbr.rel (%p147) target = $region24
      $region23: #{tpu_custom_call.1} parent=5 // pred_region
        // Predicated region
        $region25: #{tpu_custom_call.1} parent=23 // pred_check
          %p150 = pneg %p49
        $region26: #{tpu_custom_call.1} parent=23 // pred_check_branch
          %152 = sbr.rel (%p150) target = $region28
        $region27: #{tpu_custom_call.1} parent=23 // pred_region
          #allocation7 [shape = 'u32[6]{0}', space=smem, size = 0x18, scoped, tag = 'DMA stride descriptor']
          %s153 = sand.u32 %s39, 1
          %s154 = scalar_lea.sflag [#allocation3], %s153
          %s155 = sand.u32 %s39, 1
          %s156 = smul.addr %s155, 32
          %s157 = scalar_lea.vmem [#allocation2], %s156
          %s158 = smul.u32 4, %s23
          %s159 = ssub.s32 1, %s158
          %s160 = smul.u32 8, %s159
          %s161 = ssub.s32 32, %s160
          %s162 = sshll.u32 %s161, 4
          %163 = vsyncadd %s154, %s162
          %p164 = scmp.ne.s32.totalorder 0, %s160
          %s165 = smul.addr %s22, 4
          %s166 = sadd.s32 %s158, %s165
          %s167 = smul.addr %s166, 2
          %s168 = scalar_lea.hbm %s0, %s167
          %s169 = smul.u32 2, %s159
          %s170 = smul.u32 %s169, 4
          %s172 = sshll.u32 1, 14
          %s173 = sxor.u32 4294967295, %s172
          %s175 = sld [smem:[#allocation0]]
          %s176 = sadd.s32 2, %s175
          %s178 = sshll.u32 7, 26
          %s179 = sxor.u32 4294967295, %s178
          %s180 = sand.u32 0, %s179
          %s181 = sshll.u32 %s176, 26
          %s182 = sor.u32 %s180, %s181
          %s183 = sshll.u32 %s168, 4
          %s184 = int_to_ptr.hbm [resolvable:$true] %s183
          %s185 = sshll.u32 %s157, 4
          %s186 = int_to_ptr.vmem [resolvable:$true] %s185
          %s187 = sshll.u32 %s170, 4
          %192 = sst [smem:[#allocation7]] 32
          %s193 = scalar_lea.smem [#allocation7], 1
          %194 = sst [smem:[%s193]] 128
          %s195 = scalar_lea.smem [#allocation7], 2
          %196 = sst [smem:[%s195]] %s159
          %s197 = scalar_lea.smem [#allocation7], 3
          %198 = sst [smem:[%s197]] 32
          %s199 = scalar_lea.smem [#allocation7], 4
          %200 = sst [smem:[%s199]] 32
          %s201 = scalar_lea.smem [#allocation7], 5
          %202 = sst [smem:[%s201]] 2
          %204 = dma.general (%p164), %s184, %s187, %s186, %s154, [#allocation6], [#allocation7], %s182, 0
        $region28: #{tpu_custom_call.1} parent=23 // pred_fallthru
          _
      $region24: #{tpu_custom_call.1} parent=5 // pred_fallthru
        _
      %p205 = scmp.le.s32.totalorder 1, %s15
      %p206 = scmp.lt.s32.totalorder %s15, 3
      %p207 = pnand %p205, %p206
      %p208 = pneg %p207
      // Predicated region
      $region29: #{tpu_custom_call.1} parent=5 // pred_check
        _
      $region30: #{tpu_custom_call.1} parent=5 // pred_check_branch
        %210 = sbr.rel (%p207) target = $region32
      $region31: #{tpu_custom_call.1} parent=5 // pred_region
        %s211 = ssub.s32 %s15, 1
        %s212 = sand.u32 %s42, 1
        %s213 = scalar_lea.sflag [#allocation3], %s212
        %s214 = sand.u32 %s42, 1
        %s215 = smul.addr %s214, 32
        %s216 = scalar_lea.vmem [#allocation2], %s215
        // Predicated region
        $region33: #{tpu_custom_call.1} parent=31 // pred_check
          %p217 = pneg %p55
        $region34: #{tpu_custom_call.1} parent=31 // pred_check_branch
          %219 = sbr.rel (%p217) target = $region36
        $region35: #{tpu_custom_call.1} parent=31 // pred_region
          %221 = dma.done %s213, 512
        $region36: #{tpu_custom_call.1} parent=31 // pred_fallthru
          _
        %s222 = sand.u32 %s42, 1
        %s223 = scalar_lea.sflag [#allocation3], %s222
        %s224 = sand.u32 %s42, 1
        %s225 = smul.addr %s224, 32
        %s226 = scalar_lea.vmem [#allocation2], %s225
        %p227 = pneg %p55
        %p228 = pneg %p52
        %p229 = pneg %p76
        %p230 = pneg %p73
        %p231 = pneg %p97
        %p232 = pneg %p94
        %p233 = pneg %p125
        %p234 = pneg %p122
        %s235 = sand.u32 %s112, 1
        %s236 = scalar_lea.sflag [#allocation4], %s235
        %s237 = sand.u32 %s112, 1
        %s238 = smul.addr %s237, 32
        %s239 = scalar_lea.vmem [#allocation5], %s238
        %s240 = smul.u32 4, %s25
        %s241 = ssub.s32 1, %s240
        %s242 = smul.u32 8, %s241
        %s243 = smul.u32 4, %s25
        %s244 = ssub.s32 1, %s243
        %s245 = smul.u32 8, %s244
        %v246 = vld [vmem:[%s216] sm:$0xff]
        %v247 = vld [vmem:[%s216 + $0x8] sm:$0xff]
        %v248 = vld [vmem:[%s216 + $0x10] sm:$0xff]
        %v249 = vld [vmem:[%s216 + $0x18] sm:$0xff]
        %v250 = vadd.f32 %v246, %v247
        %v251 = vadd.f32 %v250, %v248
        %v252 = vadd.f32 %v251, %v249
        %v253 = vrcp.pop 4.0
        %v254 = vmul.f32 4.0, %v253
        %v255 = vsub.f32 1.0, %v254
        %v256 = vmul.f32 %v253, %v255
        %v257 = vadd.f32 %v253, %v256
        %vm258 = vweird.f32 %v253
        %v259 = vsel %vm258, %v253, %v257
        %v260 = vmul.f32 %v252, %v259
        %v261 = vsub.f32 %v246, %v260
        %v262 = vsub.f32 %v247, %v260
        %v263 = vsub.f32 %v248, %v260
        %v264 = vsub.f32 %v249, %v260
        %v265 = vmul.f32 %v261, %v261
        %v266 = vmul.f32 %v262, %v262
        %v267 = vmul.f32 %v263, %v263
        %v268 = vmul.f32 %v264, %v264
        %v269 = vadd.f32 %v265, %v266
        %v270 = vadd.f32 %v269, %v267
        %v271 = vadd.f32 %v270, %v268
        %v272 = vmul.f32 %v271, 0.33333334
        %v273 = vadd.f32 %v272, 1e-08
        %v274 = vrsqrt.pop %v273
        %v275 = vmul.f32 %v274, %v273
        %v276 = vmul.f32 %v275, %v274
        %v277 = vmul.f32 0.5, %v276
        %v278 = vsub.f32 1.5, %v277
        %v279 = vmul.f32 %v274, %v278
        %vm280 = vweird.f32 %v273
        %vm281 = vweird.f32 %v274
        %vm282 = vmor %vm280, %vm281
        %v283 = vsel %vm282, %v274, %v279
        %v284 = vmul.f32 %v261, %v283
        %v285 = vmul.f32 %v262, %v283
        %v286 = vmul.f32 %v263, %v283
        %v287 = vmul.f32 %v264, %v283
        %v288 = vld [vmem:[%s1] sm:$0x1]
        %v289 = vld [vmem:[%s1 + $0x1] sm:$0x1]
        %v290 = vld [vmem:[%s1 + $0x2] sm:$0x1]
        %v291 = vld [vmem:[%s1 + $0x3] sm:$0x1]
        %v296 = vperm.slane %v288, 0
        %v297 = vperm.slane %v289, 0
        %v298 = vperm.slane %v290, 0
        %v299 = vperm.slane %v291, 0
        %300 = vset.pattern.permute.xlu0 0
        %301 = vperm.xlu0 %300, %v296
        %v302 = vpop.permute.xlu0 %301
        %304 = vset.pattern.permute.xlu0 0
        %305 = vperm.xlu0 %304, %v297
        %v306 = vpop.permute.xlu0 %305
        %308 = vset.pattern.permute.xlu0 0
        %309 = vperm.xlu0 %308, %v298
        %v310 = vpop.permute.xlu0 %309
        %312 = vset.pattern.permute.xlu0 0
        %313 = vperm.xlu0 %312, %v299
        %v314 = vpop.permute.xlu0 %313
        %v316 = vmul.f32 %v284, %v302
        %v317 = vmul.f32 %v285, %v306
        %v318 = vmul.f32 %v286, %v310
        %v319 = vmul.f32 %v287, %v314
        %v320 = vld [vmem:[%s2] sm:$0x1]
        %v321 = vld [vmem:[%s2 + $0x1] sm:$0x1]
        %v322 = vld [vmem:[%s2 + $0x2] sm:$0x1]
        %v323 = vld [vmem:[%s2 + $0x3] sm:$0x1]
        %v328 = vperm.slane %v320, 0
        %v329 = vperm.slane %v321, 0
        %v330 = vperm.slane %v322, 0
        %v331 = vperm.slane %v323, 0
        %332 = vset.pattern.permute.xlu0 0
        %333 = vperm.xlu0 %332, %v328
        %v334 = vpop.permute.xlu0 %333
        %336 = vset.pattern.permute.xlu0 0
        %337 = vperm.xlu0 %336, %v329
        %v338 = vpop.permute.xlu0 %337
        %340 = vset.pattern.permute.xlu0 0
        %341 = vperm.xlu0 %340, %v330
        %v342 = vpop.permute.xlu0 %341
        %344 = vset.pattern.permute.xlu0 0
        %345 = vperm.xlu0 %344, %v331
        %v346 = vpop.permute.xlu0 %345
        %v348 = vadd.f32 %v316, %v334
        %v349 = vadd.f32 %v317, %v338
        %v350 = vadd.f32 %v318, %v342
        %v351 = vadd.f32 %v319, %v346
        %352 = vst [vmem:[%s239] sm:$0xff] %v348
        %353 = vst [vmem:[%s239 + $0x8] sm:$0xff] %v349
        %354 = vst [vmem:[%s239 + $0x10] sm:$0xff] %v350
        %355 = vst [vmem:[%s239 + $0x18] sm:$0xff] %v351
        %s356 = sand.u32 %s112, 1
        %s357 = scalar_lea.sflag [#allocation4], %s356
        %s358 = sand.u32 %s112, 1
        %s359 = smul.addr %s358, 32
        %s360 = scalar_lea.vmem [#allocation5], %s359
        // Predicated region
        $region37: #{tpu_custom_call.1} parent=31 // pred_check
          %p361 = pneg %p122
        $region38: #{tpu_custom_call.1} parent=31 // pred_check_branch
          %363 = sbr.rel (%p361) target = $region40
        $region39: #{tpu_custom_call.1} parent=31 // pred_region
          #allocation9 [shape = 'u32[6]{0}', space=smem, size = 0x18, scoped, tag = 'DMA stride descriptor']
          %s364 = smul.u32 4, %s25
          %s365 = ssub.s32 1, %s364
          %s366 = smul.u32 8, %s365
          %s367 = ssub.s32 32, %s366
          %s368 = sshll.u32 %s367, 4
          %369 = vsyncadd %s357, %s368
          %p370 = scmp.ne.s32.totalorder 0, %s366
          %s371 = smul.addr %s24, 4
          %s372 = sadd.s32 %s364, %s371
          %s373 = smul.addr %s372, 2
          %s374 = scalar_lea.hbm %s3, %s373
          %s375 = smul.u32 2, %s365
          %s376 = smul.u32 %s375, 4
          %s378 = sshll.u32 1, 14
          %s379 = sxor.u32 4294967295, %s378
          %s382 = sshll.u32 7, 18
          %s383 = sxor.u32 4294967295, %s382
          %s384 = sand.u32 0, %s383
          %s386 = sor.u32 %s384, 0
          %s387 = sshll.u32 %s360, 4
          %s388 = int_to_ptr.vmem [resolvable:$true] %s387
          %s389 = sshll.u32 %s374, 4
          %s390 = int_to_ptr.hbm [resolvable:$true] %s389
          %s391 = sshll.u32 %s376, 4
          %396 = sst [smem:[#allocation9]] 128
          %s397 = scalar_lea.smem [#allocation9], 1
          %398 = sst [smem:[%s397]] 32
          %s399 = scalar_lea.smem [#allocation9], 2
          %400 = sst [smem:[%s399]] %s365
          %s401 = scalar_lea.smem [#allocation9], 3
          %402 = sst [smem:[%s401]] 32
          %s403 = scalar_lea.smem [#allocation9], 4
          %404 = sst [smem:[%s403]] 32
          %s405 = scalar_lea.smem [#allocation9], 5
          %406 = sst [smem:[%s405]] 2
          %408 = dma.general (%p370), %s388, %s391, %s390, %s357, [#allocation8], [#allocation9], %s386, 0
        $region40: #{tpu_custom_call.1} parent=31 // pred_fallthru
          _
      $region32: #{tpu_custom_call.1} parent=5 // pred_fallthru
        _
      %p409 = scmp.le.s32.totalorder 2, %s15
      // Predicated region
      $region41: #{tpu_custom_call.1} parent=5 // pred_check
        %p410 = pneg %p409
      $region42: #{tpu_custom_call.1} parent=5 // pred_check_branch
        %412 = sbr.rel (%p410) target = $region44
      $region43: #{tpu_custom_call.1} parent=5 // pred_region
        %s413 = ssub.s32 %s15, 2
        // Predicated region
        $region45: #{tpu_custom_call.1} parent=43 // pred_check
          %p414 = pneg %p128
        $region46: #{tpu_custom_call.1} parent=43 // pred_check_branch
          %416 = sbr.rel (%p414) target = $region48
        $region47: #{tpu_custom_call.1} parent=43 // pred_region
          %s417 = sand.u32 %s113, 1
          %s418 = scalar_lea.sflag [#allocation4], %s417
          %s419 = sand.u32 %s113, 1
          %s420 = smul.addr %s419, 32
          %s421 = scalar_lea.vmem [#allocation5], %s420
          %423 = dma.done %s418, 512
        $region48: #{tpu_custom_call.1} parent=43 // pred_fallthru
          _
      $region44: #{tpu_custom_call.1} parent=5 // pred_fallthru
        _
    $region6: #{tpu_custom_call.1} parent=1 // loop_footer
      %s19 = sadd.s32 1, %s15
    $region7: #{tpu_custom_call.1} parent=1 // loop_footer_branch
      %14 = sbr.rel target = $region3
    $region8: #{tpu_custom_call.1} parent=1 // loop_exit
      _
    %424 = vsyncpa [#allocation3], 1
    %s425 = scalar_lea.sflag [#allocation3], 1
    %426 = vsyncpa %s425, 1
    %427 = vsyncpa [#allocation4], 1
    %s428 = scalar_lea.sflag [#allocation4], 1
    %429 = vsyncpa %s428, 1

</llo_original>
